<compile_context>
chip_gen: v7x
topology: tpu7x:2x2x1
jax: 0.10.0
libtpu: 0.0.40
codegen_flags: <defaults>
</compile_context>

<pallas_src>
import jax
import jax.numpy as jnp
from jax.experimental import pallas as pl
from jax.experimental.pallas import tpu as pltpu


def _copy_kernel(x_ref, y_ref):
    # Pure pass-through: copy the current VMEM tile of x into the output tile.
    y_ref[...] = x_ref[...]


def _round_up(a: int, b: int) -> int:
    return ((a + b - 1) // b) * b


_LANE = 128
# ~2 MiB per tile -> in+out double-buffered = ~8 MiB live, safe on v5e/v6e/v7x.
_TARGET_TILE_BYTES = 2 << 20


def _pallas_identity(x: jax.Array) -> jax.Array:
    """Identity pass of `x` through a Pallas TPU kernel (dense tiled copy)."""
    orig_shape = x.shape
    dtype = x.dtype
    n = int(x.size)
    if n == 0:
        return x

    itemsize = jnp.dtype(dtype).itemsize
    # Sublane packing multiple: 8 for 4-byte, 16 for 2-byte, 32 for 1-byte.
    sublane = max(8, 32 // itemsize)

    # Rows of the 2-D slab, rounded up to a full sublane group so every tile
    # (including the ragged last one) writes whole sublane groups.
    rows = _round_up(pl.cdiv(n, _LANE), sublane)
    n_pad = rows * _LANE

    # ~2 MiB row-tile, multiple of the sublane packing; never larger than the
    # whole slab (then it's a single exact block).
    tile_rows = _round_up(max(sublane, _TARGET_TILE_BYTES // (_LANE * itemsize)),
                          sublane)
    tile_rows = min(tile_rows, rows)

    flat = x.reshape(-1)
    if n_pad != n:
        # Tiny pad (< sublane*128 elements) so the slab is lane/sublane dense.
        flat = jnp.pad(flat, (0, n_pad - n))
    x2d = flat.reshape(rows, _LANE)

    grid = (pl.cdiv(rows, tile_rows),)
    y2d = pl.pallas_call(
        _copy_kernel,
        out_shape=jax.ShapeDtypeStruct((rows, _LANE), dtype),
        grid_spec=pltpu.PrefetchScalarGridSpec(
            num_scalar_prefetch=0,
            grid=grid,
            in_specs=[pl.BlockSpec((tile_rows, _LANE), lambda i: (i, 0))],
            out_specs=pl.BlockSpec((tile_rows, _LANE), lambda i: (i, 0)),
        ),
        # Pure identity: donate the input buffer to the output.
        input_output_aliases={0: 0},
        compiler_params=pltpu.CompilerParams(
            dimension_semantics=("parallel",),
            vmem_limit_bytes=32 << 20,
        ),
        cost_estimate=pl.CostEstimate(
            flops=0,
            transcendentals=0,
            bytes_accessed=2 * n_pad * itemsize,
        ),
    )(x2d)

    y = y2d.reshape(-1)
    if n_pad != n:
        y = y[:n]
    return y.reshape(orig_shape)


def gen_module_forward(params: jax.Array, x: jax.Array, track=True):
    """JAX/Pallas equivalent of GenModule.forward.

    Args:
      params: [B, P] flat generated parameters (from_flat is identity; unused
              by the base module's _forward).
      x:      input features of arbitrary shape (NCHW here).
      track:  True | False | 'detach' — mirrors GenModule._track.

    Returns:
      (tracked_feature, y) where y == x (identity); tracked_feature is y,
      stop_gradient(y), or None depending on `track`.
    """
    _viewed = params  # noqa: F841  (from_flat identity; kept for semantic parity)

    y = _pallas_identity(x)

    # track_feature semantics
    if track == "detach":
        tracked = jax.lax.stop_gradient(y)
    elif not track:
        tracked = None
    else:
        tracked = y
    return tracked, y


if __name__ == "__main__":
    key = jax.random.PRNGKey(0)
    k_params, k_x = jax.random.split(key)

    # Small shapes consistent with the module's forward signature:
    # params: [B, P] flat generator output; x: [B, C, H, W] features (NCHW).
    B, P = 2, 32
    C, H, W = 4, 16, 16
    params = jax.random.normal(k_params, (B, P), dtype=jnp.float32)
    x = jax.random.normal(k_x, (B, C, H, W), dtype=jnp.float32)

    tracked, y = gen_module_forward(params, x, track=True)
    y = jax.block_until_ready(y)
    tracked = jax.block_until_ready(tracked)

    # Correctness: GenModule is identity on x; tracked == y when track=True.
    assert y.shape == x.shape and y.dtype == x.dtype
    assert bool(jnp.all(y == x))
    assert bool(jnp.all(tracked == y))

    # Also exercise the 'detach' and False tracking branches.
    t_det, y_det = gen_module_forward(params, x, track="detach")
    assert bool(jnp.all(jax.block_until_ready(y_det) == x))
    t_off, y_off = gen_module_forward(params, x, track=False)
    assert t_off is None and bool(jnp.all(jax.block_until_ready(y_off) == x))

    # Exercise a shape that is NOT a multiple of 128 (ragged / padded path).
    x_odd = jax.random.normal(k_x, (3, 5, 7, 11), dtype=jnp.float32)
    _, y_odd = gen_module_forward(params, x_odd, track=True)
    assert bool(jnp.all(jax.block_until_ready(y_odd) == x_odd))

    print("KERNEL_OK")
</pallas_src>

<mosaic_0001>
module attributes {stable_mosaic.version = 11 : i64} {
  func.func @_copy_kernel(%arg0: i32, %arg1: memref<16x128xf32, #tpu.memory_space<vmem>>, %arg2: memref<16x128xf32, #tpu.memory_space<vmem>>) attributes {dimension_semantics = [#tpu.dimension_semantics<parallel>], iteration_bounds = array<i64: 1>, scalar_prefetch = 0 : i64, scratch_operands = 0 : i64, tpu.core_type = #tpu.core_type<tc>, window_params = [{transform_indices = @transform_0, window_bounds = array<i64: 16, 128>}, {transform_indices = @transform_1, window_bounds = array<i64: 16, 128>}]} {
    %c0 = arith.constant 0 : index
    %c0_0 = arith.constant 0 : index
    %0 = vector.load %arg1[%c0, %c0_0] : memref<16x128xf32, #tpu.memory_space<vmem>>, vector<16x128xf32>
    %c0_1 = arith.constant 0 : index
    %c0_2 = arith.constant 0 : index
    %1 = vector.load %arg2[%c0_1, %c0_2] : memref<16x128xf32, #tpu.memory_space<vmem>>, vector<16x128xf32>
    tpu.vector_store %arg2[%c0_1, %c0_2], %0 {strides = array<i32>} : memref<16x128xf32, #tpu.memory_space<vmem>>, vector<16x128xf32>,
    return
  }
  func.func @transform_0(%arg0: i32) -> (i32, i32) {
    %c0_i32 = arith.constant 0 : i32
    %c0_i32_0 = arith.constant 0 : i32
    return %arg0, %c0_i32 : i32, i32
  }
  func.func @transform_1(%arg0: i32) -> (i32, i32) {
    %c0_i32 = arith.constant 0 : i32
    %c0_i32_0 = arith.constant 0 : i32
    return %arg0, %c0_i32 : i32, i32
  }
}

</mosaic_0001>

<llo_original>
// kernel: tpu_custom_call.1
$region0: #{tpu_custom_call.1}
  #allocation0 [shape = 'u32[]', space=smem, size = 0x4, offset = 0x4, fixed_abs, tag = 'smem constant byte address 0x4 - core index']
  #allocation1 [shape = 'u32[144,128]{1,0:T(1,128)}', space=vmem, size = 0x12000, scoped, tag = 'internal scratch']
  %s0 = inlined_call_operand.hbm [shape: f32[16,128], index: 0, kind: input, shape index: {}, may-alias: {0,1}]
  %s1 = inlined_call_operand.hbm [shape: f32[16,128], index: 1, kind: output, shape index: {}, may-alias: {0,1}]
  %s2 = sld [smem:[#allocation0]]
  $region18: #{tpu_custom_call.1} parent=0
    _
  %s4 = ssub.s32 1, %s2
  %s5 = scalar_select 0, %s4, %s2
  $region1: #{tpu_custom_call.1} parent=0
    #allocation2 [shape = 'u8[8192]{0}', space=vmem, size = 0x2000, scoped, tag = 'input window, operand 0, single buffered']
    #allocation3 [shape = 's32[1]{0}', space=sflag, size = 0x4, scoped, tag = 'scoped memory for tpu_custom_call.1']
    #allocation4 [shape = 's32[1]{0}', space=sflag, size = 0x4, scoped, tag = 'scoped memory for tpu_custom_call.1']
    #allocation5 [shape = 'u8[8192]{0}', space=vmem, size = 0x2000, scoped, tag = 'output window, operand 0, single buffered']
    %6 = vsyncpa [#allocation3], 0
    %7 = vsyncpa [#allocation4], 0
    // Predicated region
    $region2: #{tpu_custom_call.1} parent=1 // pred_check
      _
    $region3: #{tpu_custom_call.1} parent=1 // pred_check_branch
      %9 = sbr.rel (0) target = $region5
    $region4: #{tpu_custom_call.1} parent=1 // pred_region
      %s11 = ssub.s32 256, 256
      %12 = vsyncadd [#allocation3], %s11
      %s13 = sshll.u32 [#allocation2], 4
      %s14 = int_to_ptr.vmem [resolvable:$true] %s13
      %19 = dma.hbm_to_vmem [thread:$0]  %s0, 256, %s14, [#allocation3], 128, 128, 8
    $region5: #{tpu_custom_call.1} parent=1 // pred_fallthru
      _
    // Predicated region
    $region6: #{tpu_custom_call.1} parent=1 // pred_check
      _
    $region7: #{tpu_custom_call.1} parent=1 // pred_check_branch
      %21 = sbr.rel (0) target = $region9
    $region8: #{tpu_custom_call.1} parent=1 // pred_region
      %22 = dma.done [#allocation3], 256
    $region9: #{tpu_custom_call.1} parent=1 // pred_fallthru
      _
    %v23 = vld [vmem:[#allocation2] sm:$0xff]
    %v24 = vld [vmem:[#allocation2 + $0x8] sm:$0xff]
    %25 = vst [vmem:[#allocation5] sm:$0xff] %v23
    %26 = vst [vmem:[#allocation5 + $0x8] sm:$0xff] %v24
    // Predicated region
    $region10: #{tpu_custom_call.1} parent=1 // pred_check
      _
    $region11: #{tpu_custom_call.1} parent=1 // pred_check_branch
      %28 = sbr.rel (0) target = $region13
    $region12: #{tpu_custom_call.1} parent=1 // pred_region
      %s30 = ssub.s32 256, 256
      %31 = vsyncadd [#allocation4], %s30
      %s32 = sshll.u32 [#allocation5], 4
      %s33 = int_to_ptr.vmem [resolvable:$true] %s32
      %38 = dma.vmem_to_hbm [thread:$0]  %s33, 256, %s1, [#allocation4], 128, 128, 8
    $region13: #{tpu_custom_call.1} parent=1 // pred_fallthru
      _
    // Predicated region
    $region14: #{tpu_custom_call.1} parent=1 // pred_check
      _
    $region15: #{tpu_custom_call.1} parent=1 // pred_check_branch
      %40 = sbr.rel (0) target = $region17
    $region16: #{tpu_custom_call.1} parent=1 // pred_region
      %41 = dma.done [#allocation4], 256
    $region17: #{tpu_custom_call.1} parent=1 // pred_fallthru
      _
    %42 = vsyncpa [#allocation3], 1
    %43 = vsyncpa [#allocation4], 1

</llo_original>
